<compile_context>
chip_gen: v7x
topology: tpu7x:2x2x1
jax: 0.10.0
libtpu: 0.0.40
codegen_flags: <defaults>
</compile_context>

<pallas_src>
import functools
import math

import jax
import jax.numpy as jnp
from jax.experimental import pallas as pl
from jax.experimental.pallas import tpu as pltpu


# ---------------------------------------------------------------------------
# Buffer setup (reproduces the PyTorch __init__ buffer `pe`)
# ---------------------------------------------------------------------------
def make_positional_encoding_buffer(max_len: int, d_model: int,
                                    dtype=jnp.float32) -> jnp.ndarray:
    """Returns `pe` of shape (max_len, 1, d_model), matching the PyTorch module."""
    position = jnp.arange(max_len, dtype=jnp.float32)[:, None]            # (max_len, 1)
    div_term = jnp.exp(
        jnp.arange(0, d_model, 2, dtype=jnp.float32) * (-math.log(10000.0) / d_model)
    )                                                                      # (d_model//2,)
    angles = position * div_term                                           # (max_len, d//2)
    pe = jnp.zeros((max_len, d_model), dtype=jnp.float32)
    pe = pe.at[:, 0::2].set(jnp.sin(angles))
    pe = pe.at[:, 1::2].set(jnp.cos(angles))
    return pe[:, None, :].astype(dtype)                                    # (max_len, 1, d)


# ---------------------------------------------------------------------------
# Tiling helpers
# ---------------------------------------------------------------------------
_TILE_ROW_CAP = 1024                    # tiled-add roofline saturates ~512-1024 rows
_TILE_VMEM_BUDGET = 8 * 1024 * 1024     # double-buffered per-step footprint target
_VMEM_LIMIT_BYTES = 32 * 1024 * 1024    # safe on v5e/v6e (128 MiB) and v7x (64 MiB)


def _round_up(n: int, m: int) -> int:
    return ((n + m - 1) // m) * m


def _sublane_granularity(dtype) -> int:
    # f32 packs 8 rows / vreg tile, bf16 16, int8/fp8 32.
    return {4: 8, 2: 16, 1: 32}.get(jnp.dtype(dtype).itemsize, 8)


def _choose_seq_tile(S: int, B: int, D: int, itemsize: int, g: int,
                     extra_fullwidth_bufs: int) -> int:
    """Rows per tile: VMEM-budgeted, capped, and kept small enough for >= ~8 grid steps."""
    # Per grid step (double-buffered): x-in + out (+ dropout bits / temps) full-width
    # blocks plus the narrow pe block.
    per_row = 2 * ((2 + extra_fullwidth_bufs) * B * D + D) * itemsize
    rows = max(g, (_TILE_VMEM_BUDGET // max(per_row, 1)) // g * g)
    rows = min(rows, _TILE_ROW_CAP)
    # Keep the grid >= ~8 steps when S is large (pipelining + v7x megacore sharding).
    rows = min(rows, max(g, _round_up(pl.cdiv(S, 8), g)))
    return max(g, rows)


def _dropout_threshold(p: float):
    # Drop iff bits < threshold.  threshold = round(p * 2^32); truncation error <= 2^-32.
    return jnp.uint32(min(int(round(p * 4294967296.0)), 4294967295))


# ---------------------------------------------------------------------------
# Kernels (lane-dense 2D blocks: x/out/bits (ts, B*D), pe (ts, D))
# pe is broadcast across batch with B static per-segment adds (no concat temp).
# ---------------------------------------------------------------------------
def _pe_add_kernel(x_ref, pe_ref, o_ref, *, batch: int, d: int):
    pe = pe_ref[...]
    for b in range(batch):
        lo, hi = b * d, (b + 1) * d
        o_ref[:, lo:hi] = (x_ref[:, lo:hi] + pe).astype(o_ref.dtype)


def _pe_add_dropout_bits_kernel(x_ref, pe_ref, bits_ref, o_ref, *,
                                batch: int, d: int, p: float):
    # Portable path: random bits are a regular streamed input (works on any backend).
    threshold = _dropout_threshold(p)
    scale = jnp.asarray(1.0 / (1.0 - p), dtype=x_ref.dtype)
    pe = pe_ref[...]
    for b in range(batch):
        lo, hi = b * d, (b + 1) * d
        y = x_ref[:, lo:hi] + pe
        keep = bits_ref[:, lo:hi] >= threshold
        o_ref[:, lo:hi] = jnp.where(keep, y * scale, jnp.zeros_like(y)).astype(o_ref.dtype)


def _pe_add_dropout_prng_kernel(seed_ref, x_ref, pe_ref, o_ref, *,
                                batch: int, d: int, p: float):
    # TPU-only path: hardware PRNG, no extra HBM traffic for the random stream.
    # Per-block seeding => mask depends on the tile choice (documented caveat).
    pltpu.prng_seed(seed_ref[0] + pl.program_id(0))
    bits = pltpu.bitcast(pltpu.prng_random_bits(x_ref.shape), jnp.uint32)
    threshold = _dropout_threshold(p)
    scale = jnp.asarray(1.0 / (1.0 - p), dtype=x_ref.dtype)
    pe = pe_ref[...]
    for b in range(batch):
        lo, hi = b * d, (b + 1) * d
        y = x_ref[:, lo:hi] + pe
        keep = bits[:, lo:hi] >= threshold
        o_ref[:, lo:hi] = jnp.where(keep, y * scale, jnp.zeros_like(y)).astype(o_ref.dtype)


# ---------------------------------------------------------------------------
# Wrapper
# ---------------------------------------------------------------------------
def positional_encoding_forward(x: jnp.ndarray,
                                pe: jnp.ndarray,
                                *,
                                p: float = 0.1,
                                training: bool = False,
                                seed: int = 0,
                                donate_x: bool = False,
                                xla_fast_path_max_bytes: int = 0) -> jnp.ndarray:
    """x: (seq_len, batch, d_model); pe: (max_len, 1, d_model). Returns x's shape/dtype."""
    S, B, D = x.shape
    dtype = x.dtype
    itemsize = jnp.dtype(dtype).itemsize
    assert pe.shape[0] >= S and pe.shape[-1] == D

    pe_s = pe[:S, 0, :].astype(dtype)                       # (S, D)
    apply_dropout = training and p > 0.0
    if apply_dropout and p >= 1.0:                          # torch drops everything at p=1
        return jnp.zeros_like(x)

    # Optional pure-XLA fast path for tiny inputs (launch/pipeline-overhead dominated).
    # Disabled by default (threshold 0) so the Pallas kernel is always exercised below.
    if S * B * D * itemsize <= xla_fast_path_max_bytes:
        y = x + pe_s[:, None, :]
        if apply_dropout:
            keep = jax.random.bernoulli(jax.random.PRNGKey(seed), 1.0 - p, y.shape)
            y = jnp.where(keep, y / (1.0 - p), 0.0)
        return y.astype(dtype)

    g = _sublane_granularity(dtype)
    x2 = x.reshape(S, B * D)                                # lane-dense minor dim

    extra_bufs = 2 if apply_dropout else 0
    ts = _choose_seq_tile(S, B, D, itemsize, g, extra_bufs)
    grid = (pl.cdiv(S, ts),)                                # partial last block handled by Pallas

    out_shape = jax.ShapeDtypeStruct((S, B * D), dtype)
    cparams = pltpu.CompilerParams(
        dimension_semantics=("parallel",),                  # independent blocks -> both TCs on v7x
        vmem_limit_bytes=_VMEM_LIMIT_BYTES,
    )

    if not apply_dropout:
        out2 = pl.pallas_call(
            functools.partial(_pe_add_kernel, batch=B, d=D),
            out_shape=out_shape,
            grid_spec=pltpu.PrefetchScalarGridSpec(
                num_scalar_prefetch=0,
                grid=grid,
                in_specs=[pl.BlockSpec((ts, B * D), lambda i: (i, 0)),
                          pl.BlockSpec((ts, D), lambda i: (i, 0))],
                out_specs=pl.BlockSpec((ts, B * D), lambda i: (i, 0)),
            ),
            compiler_params=cparams,
            input_output_aliases=({0: 0} if donate_x else {}),
        )(x2, pe_s)
    elif jax.default_backend() == "tpu":
        # Hardware-PRNG dropout (no random-bits HBM traffic).
        seed_arr = jnp.array([seed], dtype=jnp.int32)
        out2 = pl.pallas_call(
            functools.partial(_pe_add_dropout_prng_kernel, batch=B, d=D, p=p),
            out_shape=out_shape,
            grid_spec=pltpu.PrefetchScalarGridSpec(
                num_scalar_prefetch=1,                      # seed lands in SMEM
                grid=grid,
                in_specs=[pl.BlockSpec((ts, B * D), lambda i, s: (i, 0)),
                          pl.BlockSpec((ts, D), lambda i, s: (i, 0))],
                out_specs=pl.BlockSpec((ts, B * D), lambda i, s: (i, 0)),
            ),
            compiler_params=cparams,
            input_output_aliases=({1: 0} if donate_x else {}),
        )(seed_arr, x2, pe_s)
    else:
        # Portable dropout: draw the random stream once in the wrapper, stream it in.
        bits = jax.random.bits(jax.random.PRNGKey(seed), (S, B * D), dtype=jnp.uint32)
        out2 = pl.pallas_call(
            functools.partial(_pe_add_dropout_bits_kernel, batch=B, d=D, p=p),
            out_shape=out_shape,
            grid_spec=pltpu.PrefetchScalarGridSpec(
                num_scalar_prefetch=0,
                grid=grid,
                in_specs=[pl.BlockSpec((ts, B * D), lambda i: (i, 0)),
                          pl.BlockSpec((ts, D), lambda i: (i, 0)),
                          pl.BlockSpec((ts, B * D), lambda i: (i, 0))],
                out_specs=pl.BlockSpec((ts, B * D), lambda i: (i, 0)),
            ),
            compiler_params=cparams,
            input_output_aliases=({0: 0} if donate_x else {}),
        )(x2, pe_s, bits)

    return out2.reshape(S, B, D)


# ---------------------------------------------------------------------------
# Main
# ---------------------------------------------------------------------------
if __name__ == "__main__":
    # Shapes consistent with forward(): (seq_len, batch, d_model).
    seq_len, batch, d_model, max_len = 8, 2, 128, 64

    key = jax.random.PRNGKey(0)
    k1, k2 = jax.random.split(key)
    x = jax.random.normal(k1, (seq_len, batch, d_model), dtype=jnp.float32)
    pe = make_positional_encoding_buffer(max_len, d_model, dtype=jnp.float32)
    ref = x + pe[:seq_len]

    # --- Eval-mode forward (dropout == identity), lane-aligned d_model. ---
    out = jax.block_until_ready(positional_encoding_forward(x, pe, p=0.1, training=False))
    assert out.shape == (seq_len, batch, d_model)
    assert out.dtype == x.dtype
    assert jnp.allclose(out, ref, atol=1e-6, rtol=1e-6), "eval-mode mismatch vs reference"

    # --- Eval-mode, non-multiple-of-8 seq_len and unaligned d_model (partial block path). ---
    s2, b2, d2 = 6, 3, 32
    x_b = jax.random.normal(k2, (s2, b2, d2), dtype=jnp.float32)
    pe_b = make_positional_encoding_buffer(max_len, d2, dtype=jnp.float32)
    ref_b = x_b + pe_b[:s2]
    out_b = jax.block_until_ready(positional_encoding_forward(x_b, pe_b, p=0.1, training=False))
    assert out_b.shape == (s2, b2, d2)
    assert jnp.allclose(out_b, ref_b, atol=1e-6, rtol=1e-6), "partial-block mismatch vs reference"

    # --- Train-mode dropout (HW PRNG on TPU, jax.random bits otherwise). ---
    out_tr = jax.block_until_ready(
        positional_encoding_forward(x, pe, p=0.1, training=True, seed=123))
    assert out_tr.shape == x.shape and out_tr.dtype == x.dtype
    assert bool(jnp.all(jnp.isfinite(out_tr)))
    scale = jnp.float32(1.0 / (1.0 - 0.1))
    expected_kept = ref * scale
    kept = out_tr != 0.0
    # Every non-dropped element must equal (x + pe) / (1 - p).
    assert jnp.allclose(jnp.where(kept, out_tr, expected_kept), expected_kept,
                        atol=1e-5, rtol=1e-5), "dropout kept-values mismatch"
    frac_kept = float(jnp.mean(kept.astype(jnp.float32)))
    assert 0.5 < frac_kept < 1.0, f"implausible dropout keep fraction {frac_kept}"

    print("KERNEL_OK")
</pallas_src>

<mosaic_0001>
module attributes {stable_mosaic.version = 11 : i64} {
  func.func @_pe_add_kernel(%arg0: i32, %arg1: memref<8x256xf32, #tpu.memory_space<vmem>>, %arg2: memref<8x128xf32, #tpu.memory_space<vmem>>, %arg3: memref<8x256xf32, #tpu.memory_space<vmem>>) attributes {dimension_semantics = [#tpu.dimension_semantics<parallel>], iteration_bounds = array<i64: 1>, scalar_prefetch = 0 : i64, scratch_operands = 0 : i64, tpu.core_type = #tpu.core_type<tc>, window_params = [{transform_indices = @transform_0, window_bounds = array<i64: 8, 256>}, {transform_indices = @transform_1, window_bounds = array<i64: 8, 128>}, {transform_indices = @transform_2, window_bounds = array<i64: 8, 256>}]} {
    %c0 = arith.constant 0 : index
    %c0_0 = arith.constant 0 : index
    %0 = vector.load %arg2[%c0, %c0_0] : memref<8x128xf32, #tpu.memory_space<vmem>>, vector<8x128xf32>
    %c0_1 = arith.constant 0 : index
    %c0_2 = arith.constant 0 : index
    %1 = vector.load %arg1[%c0_1, %c0_2] : memref<8x256xf32, #tpu.memory_space<vmem>>, vector<8x128xf32>
    %2 = arith.addf %1, %0 : vector<8x128xf32>
    %c0_3 = arith.constant 0 : index
    %c0_4 = arith.constant 0 : index
    %3 = vector.load %arg3[%c0_3, %c0_4] : memref<8x256xf32, #tpu.memory_space<vmem>>, vector<8x128xf32>
    tpu.vector_store %arg3[%c0_3, %c0_4], %2 {strides = array<i32>} : memref<8x256xf32, #tpu.memory_space<vmem>>, vector<8x128xf32>,
    %c0_5 = arith.constant 0 : index
    %c128 = arith.constant 128 : index
    %4 = vector.load %arg1[%c0_5, %c128] : memref<8x256xf32, #tpu.memory_space<vmem>>, vector<8x128xf32>
    %5 = arith.addf %4, %0 : vector<8x128xf32>
    %c0_6 = arith.constant 0 : index
    %c128_7 = arith.constant 128 : index
    %6 = vector.load %arg3[%c0_6, %c128_7] : memref<8x256xf32, #tpu.memory_space<vmem>>, vector<8x128xf32>
    tpu.vector_store %arg3[%c0_6, %c128_7], %5 {strides = array<i32>} : memref<8x256xf32, #tpu.memory_space<vmem>>, vector<8x128xf32>,
    return
  }
  func.func @transform_0(%arg0: i32) -> (i32, i32) {
    %c0_i32 = arith.constant 0 : i32
    %c0_i32_0 = arith.constant 0 : i32
    return %arg0, %c0_i32 : i32, i32
  }
  func.func @transform_1(%arg0: i32) -> (i32, i32) {
    %c0_i32 = arith.constant 0 : i32
    %c0_i32_0 = arith.constant 0 : i32
    return %arg0, %c0_i32 : i32, i32
  }
  func.func @transform_2(%arg0: i32) -> (i32, i32) {
    %c0_i32 = arith.constant 0 : i32
    %c0_i32_0 = arith.constant 0 : i32
    return %arg0, %c0_i32 : i32, i32
  }
}

</mosaic_0001>

<llo_original>
// kernel: tpu_custom_call.1
$region0: #{tpu_custom_call.1}
  #allocation0 [shape = 'u32[]', space=smem, size = 0x4, offset = 0x4, fixed_abs, tag = 'smem constant byte address 0x4 - core index']
  #allocation1 [shape = 'u32[144,128]{1,0:T(1,128)}', space=vmem, size = 0x12000, scoped, tag = 'internal scratch']
  %s0 = inlined_call_operand.hbm [shape: f32[8,256], index: 0, kind: input, shape index: {}]
  %s1 = inlined_call_operand.hbm [shape: f32[8,128], index: 1, kind: input, shape index: {}]
  %s2 = inlined_call_operand.hbm [shape: f32[8,256], index: 2, kind: output, shape index: {}]
  %s3 = sld [smem:[#allocation0]]
  $region26: #{tpu_custom_call.1} parent=0
    _
  %s5 = ssub.s32 1, %s3
  %s6 = scalar_select 0, %s5, %s3
  $region1: #{tpu_custom_call.1} parent=0
    #allocation2 [shape = 'u8[8192]{0}', space=vmem, size = 0x2000, scoped, tag = 'input window, operand 0, single buffered']
    #allocation3 [shape = 's32[1]{0}', space=sflag, size = 0x4, scoped, tag = 'scoped memory for tpu_custom_call.1']
    #allocation4 [shape = 's32[1]{0}', space=sflag, size = 0x4, scoped, tag = 'scoped memory for tpu_custom_call.1']
    #allocation5 [shape = 'u8[4096]{0}', space=vmem, size = 0x1000, scoped, tag = 'input window, operand 1, single buffered']
    #allocation6 [shape = 's32[1]{0}', space=sflag, size = 0x4, scoped, tag = 'scoped memory for tpu_custom_call.1']
    #allocation7 [shape = 'u8[8192]{0}', space=vmem, size = 0x2000, scoped, tag = 'output window, operand 0, single buffered']
    %7 = vsyncpa [#allocation3], 0
    %8 = vsyncpa [#allocation6], 0
    %9 = vsyncpa [#allocation4], 0
    // Predicated region
    $region2: #{tpu_custom_call.1} parent=1 // pred_check
      _
    $region3: #{tpu_custom_call.1} parent=1 // pred_check_branch
      %11 = sbr.rel (0) target = $region5
    $region4: #{tpu_custom_call.1} parent=1 // pred_region
      %s13 = ssub.s32 256, 256
      %14 = vsyncadd [#allocation3], %s13
      %s16 = sshll.u32 [#allocation2], 4
      %s17 = int_to_ptr.vmem [resolvable:$true] %s16
      %19 = dma.hbm_to_vmem [thread:$0]  %s0, 256, %s17, [#allocation3]
    $region5: #{tpu_custom_call.1} parent=1 // pred_fallthru
      _
    // Predicated region
    $region6: #{tpu_custom_call.1} parent=1 // pred_check
      _
    $region7: #{tpu_custom_call.1} parent=1 // pred_check_branch
      %21 = sbr.rel (0) target = $region9
    $region8: #{tpu_custom_call.1} parent=1 // pred_region
      %s23 = ssub.s32 128, 128
      %24 = vsyncadd [#allocation6], %s23
      %s26 = sshll.u32 [#allocation5], 4
      %s27 = int_to_ptr.vmem [resolvable:$true] %s26
      %29 = dma.hbm_to_vmem [thread:$0]  %s1, 128, %s27, [#allocation6]
    $region9: #{tpu_custom_call.1} parent=1 // pred_fallthru
      _
    // Predicated region
    $region10: #{tpu_custom_call.1} parent=1 // pred_check
      _
    $region11: #{tpu_custom_call.1} parent=1 // pred_check_branch
      %31 = sbr.rel (0) target = $region13
    $region12: #{tpu_custom_call.1} parent=1 // pred_region
      %32 = dma.done [#allocation3], 256
    $region13: #{tpu_custom_call.1} parent=1 // pred_fallthru
      _
    // Predicated region
    $region14: #{tpu_custom_call.1} parent=1 // pred_check
      _
    $region15: #{tpu_custom_call.1} parent=1 // pred_check_branch
      %34 = sbr.rel (0) target = $region17
    $region16: #{tpu_custom_call.1} parent=1 // pred_region
      %35 = dma.done [#allocation6], 128
    $region17: #{tpu_custom_call.1} parent=1 // pred_fallthru
      _
    %v36 = vld [vmem:[#allocation5] sm:$0xff]
    %v37 = vld [vmem:[#allocation2] sm:$0xff]
    %v38 = vadd.f32 %v37, %v36
    %39 = vst [vmem:[#allocation7] sm:$0xff] %v38
    %v40 = vld [vmem:[#allocation2 + $0x8] sm:$0xff]
    %v41 = vadd.f32 %v40, %v36
    %42 = vst [vmem:[#allocation7 + $0x8] sm:$0xff] %v41
    // Predicated region
    $region18: #{tpu_custom_call.1} parent=1 // pred_check
      _
    $region19: #{tpu_custom_call.1} parent=1 // pred_check_branch
      %44 = sbr.rel (0) target = $region21
    $region20: #{tpu_custom_call.1} parent=1 // pred_region
      %s46 = ssub.s32 256, 256
      %47 = vsyncadd [#allocation4], %s46
      %s49 = sshll.u32 [#allocation7], 4
      %s50 = int_to_ptr.vmem [resolvable:$true] %s49
      %52 = dma.vmem_to_hbm [thread:$0]  %s50, 256, %s2, [#allocation4]
    $region21: #{tpu_custom_call.1} parent=1 // pred_fallthru
      _
    // Predicated region
    $region22: #{tpu_custom_call.1} parent=1 // pred_check
      _
    $region23: #{tpu_custom_call.1} parent=1 // pred_check_branch
      %54 = sbr.rel (0) target = $region25
    $region24: #{tpu_custom_call.1} parent=1 // pred_region
      %55 = dma.done [#allocation4], 256
    $region25: #{tpu_custom_call.1} parent=1 // pred_fallthru
      _
    %56 = vsyncpa [#allocation3], 1
    %57 = vsyncpa [#allocation6], 1
    %58 = vsyncpa [#allocation4], 1

</llo_original>
